<compile_context>
chip_gen: v7x
topology: tpu7x:2x2x1
jax: 0.10.0
libtpu: 0.0.40
codegen_flags: <defaults>
</compile_context>

<pallas_src>
import functools

import jax
import jax.numpy as jnp
from jax.experimental import pallas as pl
from jax.experimental.pallas import tpu as pltpu


_BN = 256                       # rows/block; multiple of 32 -> sublane-dense for
                                # f32 (8), bf16 (16) and int8/fp8 (32).
_BF = 2048                      # cols/block; multiple of 128 -> unmasked vst.
_VMEM_LIMIT = 32 * 1024 * 1024  # <=32 MiB: safe on v5e/v6e and v7x's 64 MiB VMEM.


# ----------------------------- kernels ---------------------------------------

def _scale_kernel(scale_ref, x_ref, o_ref):
    # scale_ref: (bn, 1) f32; x_ref / o_ref: (bn, bf).
    x = x_ref[...].astype(jnp.float32)
    o_ref[...] = (x * scale_ref[...]).astype(o_ref.dtype)


def _scale_add_kernel(scale_ref, x_ref, r_ref, o_ref, *, split):
    # Fused ShakeDrop + residual tail: out = x * scale + shortcut, where the
    # shortcut covers only the first `split` flattened columns (the channel
    # zero-pad of the PyTorch block).  split=None -> shortcut spans all of x.
    x = x_ref[...].astype(jnp.float32)
    r = r_ref[...].astype(jnp.float32)
    if split is not None:
        bn, bf = x_ref.shape
        col = (jax.lax.broadcasted_iota(jnp.int32, (bn, bf), 1)
               + pl.program_id(1) * bf)
        r = jnp.where(col < split, r, 0.0)
    o_ref[...] = (x * scale_ref[...] + r).astype(o_ref.dtype)


# --------------------------- pallas launcher ----------------------------------

def _launch(scale2d, x2d, shortcut2d=None):
    """scale2d: (N,1) f32; x2d: (N,F); shortcut2d: (N,F0) with F0 <= F, or None."""
    N, F = x2d.shape
    bn = min(_BN, N)                    # < _BN -> full-dim block (always legal)

    if shortcut2d is None:
        bf = min(_BF, F)                # full dim, or a multiple of 128
        kernel = _scale_kernel
        operands = (scale2d, x2d)
        extra_specs = []
        flops = N * F
        bytes_accessed = scale2d.size * 4 + 2 * N * F * x2d.dtype.itemsize
    else:
        F0 = shortcut2d.shape[1]
        if F0 == F:
            bf = min(_BF, F)
            split = None
            sc_map = lambda i, j: (i, j)
        else:
            # Block width: multiple of 128 that also fits inside the narrower
            # shortcut, so no zero-padded copy is ever materialised in HBM.
            bf = min(_BF, (F0 // 128) * 128)
            split = F0
            last_sc_blk = pl.cdiv(F0, bf) - 1
            sc_map = lambda i, j: (i, jnp.minimum(j, last_sc_blk))
        kernel = functools.partial(_scale_add_kernel, split=split)
        operands = (scale2d, x2d, shortcut2d)
        extra_specs = [pl.BlockSpec((bn, bf), sc_map)]
        flops = 2 * N * F
        bytes_accessed = (scale2d.size * 4
                          + 2 * N * F * x2d.dtype.itemsize
                          + shortcut2d.size * shortcut2d.dtype.itemsize)

    return pl.pallas_call(
        kernel,
        out_shape=jax.ShapeDtypeStruct((N, F), x2d.dtype),
        grid=(pl.cdiv(N, bn), pl.cdiv(F, bf)),
        in_specs=[pl.BlockSpec((bn, 1), lambda i, j: (i, 0)),
                  pl.BlockSpec((bn, bf), lambda i, j: (i, j))] + extra_specs,
        out_specs=pl.BlockSpec((bn, bf), lambda i, j: (i, j)),
        input_output_aliases={1: 0},            # out reuses x's HBM buffer
        compiler_params=pltpu.CompilerParams(
            dimension_semantics=("parallel", "parallel"),
            vmem_limit_bytes=_VMEM_LIMIT),
        cost_estimate=pl.CostEstimate(
            flops=flops, transcendentals=0, bytes_accessed=bytes_accessed),
    )(*operands)


def _shake_scale(N, key, p_drop, alpha_range):
    """(N,1) f32 scale implementing the training branch of ShakeDropFunction."""
    k_gate, k_alpha = jax.random.split(key)
    gate = jax.random.bernoulli(k_gate, 1.0 - p_drop)           # one gate/batch
    alpha = jax.random.uniform(k_alpha, (N,), jnp.float32,
                               minval=alpha_range[0], maxval=alpha_range[1])
    scale = jnp.where(gate, jnp.ones((N,), jnp.float32), alpha)
    return scale.reshape(N, 1)


# ------------------------------ public API ------------------------------------

@functools.partial(jax.jit, static_argnames=("training", "p_drop", "alpha_range"))
def shake_drop(x, key, *, training=True, p_drop=0.5, alpha_range=(-1.0, 1.0)):
    """Standalone ShakeDrop forward.  x: (N, C, H, W) -> (out, scale (N,))."""
    N = x.shape[0]
    if not training:
        # Eval: compile-time-constant scale -> plain jnp so XLA fuses it.
        scale = jnp.full((N,), 1.0 - p_drop, dtype=jnp.float32)
        return (1.0 - p_drop) * x, scale
    scale2d = _shake_scale(N, key, p_drop, alpha_range)
    out2d = _launch(scale2d, x.reshape(N, -1))
    return out2d.reshape(x.shape), scale2d.reshape(N)


@functools.partial(jax.jit, static_argnames=("training", "p_drop", "alpha_range"))
def shake_drop_residual(h, shortcut, key, *, training=True, p_drop=0.5,
                        alpha_range=(-1.0, 1.0)):
    """Fused tail of ShakeBasicBlock: out = shake_drop(h) + channel_pad(shortcut).

    h: (N, C, H, W); shortcut: (N, C0, H, W) with C0 <= C (zero channel pad,
    matching torch.cat([h0, pad_zero], dim=1) in the PyTorch block).
    """
    N, C, H, W = h.shape
    c0 = shortcut.shape[1]
    if not training:
        out = (1.0 - p_drop) * h
        out = out.at[:, :c0].add(shortcut.astype(out.dtype))
        scale = jnp.full((N,), 1.0 - p_drop, dtype=jnp.float32)
        return out, scale

    scale2d = _shake_scale(N, key, p_drop, alpha_range)
    h2d = h.reshape(N, -1)
    sc2d = shortcut.reshape(N, -1)
    F, F0 = h2d.shape[1], sc2d.shape[1]
    if F0 < 128 and F0 < F:
        # Pathological tiny shortcut (< 1 lane-tile); pad cost is negligible.
        sc2d = jnp.pad(sc2d, ((0, 0), (0, F - F0)))
    out2d = _launch(scale2d, h2d, sc2d)
    return out2d.reshape(h.shape), scale2d.reshape(N)


# ------------------------------ demo / check -----------------------------------

if __name__ == "__main__":
    key = jax.random.PRNGKey(0)
    k_x, k_sc, k_sc_full, k1, k2, k3 = jax.random.split(key, 6)

    N, C, H, W = 2, 4, 16, 16
    x = jax.random.normal(k_x, (N, C, H, W), dtype=jnp.float32)
    p_drop, alpha_range = 0.5, (-1.0, 1.0)

    # 1) Standalone ShakeDrop, training mode (Pallas path).
    out_tr, scale_tr = shake_drop(x, k1, training=True, p_drop=p_drop,
                                  alpha_range=alpha_range)
    out_tr = jax.block_until_ready(out_tr)
    assert jnp.allclose(out_tr, x * scale_tr.reshape(N, 1, 1, 1),
                        atol=1e-6, rtol=1e-6)

    # 2) Standalone ShakeDrop, eval mode (plain jnp path).
    out_ev, _ = shake_drop(x, k2, training=False, p_drop=p_drop,
                           alpha_range=alpha_range)
    out_ev = jax.block_until_ready(out_ev)
    assert jnp.allclose(out_ev, (1.0 - p_drop) * x, atol=1e-6, rtol=1e-6)

    # 3) Fused ShakeDrop + residual add with channel pad (C0 < C).
    shortcut = jax.random.normal(k_sc, (N, C // 2, H, W), dtype=jnp.float32)
    out_res, scale_res = shake_drop_residual(x, shortcut, k3, training=True,
                                             p_drop=p_drop, alpha_range=alpha_range)
    out_res = jax.block_until_ready(out_res)
    ref_res = x * scale_res.reshape(N, 1, 1, 1)
    ref_res = ref_res.at[:, :C // 2].add(shortcut)
    assert jnp.allclose(out_res, ref_res, atol=1e-6, rtol=1e-6)

    # 4) Fused path with a full-width shortcut (C0 == C, no channel pad).
    shortcut_full = jax.random.normal(k_sc_full, (N, C, H, W), dtype=jnp.float32)
    out_res2, scale_res2 = shake_drop_residual(x, shortcut_full, k3, training=True,
                                               p_drop=p_drop, alpha_range=alpha_range)
    out_res2 = jax.block_until_ready(out_res2)
    ref_res2 = x * scale_res2.reshape(N, 1, 1, 1) + shortcut_full
    assert jnp.allclose(out_res2, ref_res2, atol=1e-6, rtol=1e-6)

    print("KERNEL_OK")
</pallas_src>

<mosaic_0001>
module attributes {stable_mosaic.version = 11 : i64} {
  func.func @_scale_kernel(%arg0: i32, %arg1: i32, %arg2: memref<2x1xf32, #tpu.memory_space<vmem>>, %arg3: memref<2x1024xf32, #tpu.memory_space<vmem>>, %arg4: memref<2x1024xf32, #tpu.memory_space<vmem>>) attributes {dimension_semantics = [#tpu.dimension_semantics<parallel>, #tpu.dimension_semantics<parallel>], iteration_bounds = array<i64: 1, 1>, scalar_prefetch = 0 : i64, scratch_operands = 0 : i64, tpu.core_type = #tpu.core_type<tc>, window_params = [{transform_indices = @transform_0, window_bounds = array<i64: 2, 1>}, {transform_indices = @transform_1, window_bounds = array<i64: 2, 1024>}, {transform_indices = @transform_2, window_bounds = array<i64: 2, 1024>}]} {
    %c0 = arith.constant 0 : index
    %c0_0 = arith.constant 0 : index
    %0 = vector.load %arg3[%c0, %c0_0] : memref<2x1024xf32, #tpu.memory_space<vmem>>, vector<2x1024xf32>
    %c0_1 = arith.constant 0 : index
    %c0_2 = arith.constant 0 : index
    %1 = vector.load %arg2[%c0_1, %c0_2] : memref<2x1xf32, #tpu.memory_space<vmem>>, vector<2x1xf32>
    %2 = vector.broadcast %1 : vector<2x1xf32> to vector<2x1024xf32>
    %3 = arith.mulf %0, %2 : vector<2x1024xf32>
    %c0_3 = arith.constant 0 : index
    %c0_4 = arith.constant 0 : index
    %4 = vector.load %arg4[%c0_3, %c0_4] : memref<2x1024xf32, #tpu.memory_space<vmem>>, vector<2x1024xf32>
    tpu.vector_store %arg4[%c0_3, %c0_4], %3 {strides = array<i32>} : memref<2x1024xf32, #tpu.memory_space<vmem>>, vector<2x1024xf32>,
    return
  }
  func.func @transform_0(%arg0: i32, %arg1: i32) -> (i32, i32) {
    %c0_i32 = arith.constant 0 : i32
    %c0_i32_0 = arith.constant 0 : i32
    return %arg0, %c0_i32 : i32, i32
  }
  func.func @transform_1(%arg0: i32, %arg1: i32) -> (i32, i32) {
    %c0_i32 = arith.constant 0 : i32
    return %arg0, %arg1 : i32, i32
  }
  func.func @transform_2(%arg0: i32, %arg1: i32) -> (i32, i32) {
    %c0_i32 = arith.constant 0 : i32
    return %arg0, %arg1 : i32, i32
  }
}

</mosaic_0001>

<llo_original>
// kernel: shake_drop.1
$region0: #{shake_drop.1}
  #allocation0 [shape = 'u32[]', space=smem, size = 0x4, offset = 0x4, fixed_abs, tag = 'smem constant byte address 0x4 - core index']
  #allocation1 [shape = 'u32[144,128]{1,0:T(1,128)}', space=vmem, size = 0x12000, scoped, tag = 'internal scratch']
  %s0 = inlined_call_operand.vmem [shape: f32[2,1], index: 0, kind: input, shape index: {}]
  %s1 = inlined_call_operand.vmem [shape: f32[2,1024], index: 1, kind: input, shape index: {}, may-alias: {1,2}]
  %s2 = inlined_call_operand.vmem [shape: f32[2,1024], index: 2, kind: output, shape index: {}, may-alias: {1,2}]
  %s3 = sld [smem:[#allocation0]]
  $region18: #{shake_drop.1} parent=0
    _
  %s5 = ssub.s32 1, %s3
  %s6 = scalar_select 0, %s5, %s3
  // Predicated region
  $region2: #{shake_drop.1} parent=0 // pred_check
    _
  $region3: #{shake_drop.1} parent=0 // pred_check_branch
    %8 = sbr.rel (0) target = $region5
  $region4: #{shake_drop.1} parent=0 // pred_region
    _
  $region5: #{shake_drop.1} parent=0 // pred_fallthru
    _
  // Predicated region
  $region6: #{shake_drop.1} parent=0 // pred_check
    _
  $region7: #{shake_drop.1} parent=0 // pred_check_branch
    %10 = sbr.rel (0) target = $region9
  $region8: #{shake_drop.1} parent=0 // pred_region
    _
  $region9: #{shake_drop.1} parent=0 // pred_fallthru
    _
  %v11 = vld [vmem:[%s1] sm:$0xff]
  %v12 = vld [vmem:[%s1 + $0x8] sm:$0xff]
  %v13 = vld [vmem:[%s0] sm:$0x3]
  %15 = vset.pattern.permute.xlu0 0
  %16 = vperm.xlu0 %15, %v13
  %v17 = vpop.permute.xlu0 %16
  %v19 = vunpack.c.l.s4 269488144
  %v20 = vunpack.c.0.s8 %v19
  %v21 = vlaneseq
  %v22 = vshrl.u32 %v21, 7
  %v23 = vsub.s32 %v20, %v22
  %v24 = vrot.slane %v17, %v23
  %v26 = vmul.f32 %v11, %v24
  %v27 = vmul.f32 %v12, %v24
  %28 = vst [vmem:[%s2] sm:$0xff] %v26
  %29 = vst [vmem:[%s2 + $0x8] sm:$0xff] %v27
  // Predicated region
  $region10: #{shake_drop.1} parent=0 // pred_check
    _
  $region11: #{shake_drop.1} parent=0 // pred_check_branch
    %31 = sbr.rel (0) target = $region13
  $region12: #{shake_drop.1} parent=0 // pred_region
    _
  $region13: #{shake_drop.1} parent=0 // pred_fallthru
    _
  // Predicated region
  $region14: #{shake_drop.1} parent=0 // pred_check
    _
  $region15: #{shake_drop.1} parent=0 // pred_check_branch
    %33 = sbr.rel (0) target = $region17
  $region16: #{shake_drop.1} parent=0 // pred_region
    _
  $region17: #{shake_drop.1} parent=0 // pred_fallthru
    _

</llo_original>
